<compile_context>
chip_gen: v5e
topology: v5e:2x2
jax: 0.10.0
libtpu: 0.0.40
codegen_flags: <defaults>
</compile_context>

<pallas_src>
import jax
import jax.numpy as jnp
from jax.experimental import pallas as pl
from jax.experimental.pallas import tpu as pltpu


# ----------------------------------------------------------------------------
# Fused kernel:
#   output = sigmoid(W^T + b)                      (== sigmoid(eye @ W^T + b))
#   loss   = -(log_sigmoid(z[0, action]) * reward) (== -(log(output[0,action])*reward))
# ----------------------------------------------------------------------------
def fused_bandit_kernel(action_ref, reward_ref, wt_ref, b_ref, out_ref, loss_ref):
    a = action_ref[0]                                # scalar int32 (SMEM)
    r = reward_ref[0]                                # scalar f32  (SMEM)

    # Pre-activation. x is one-hot eye -> x @ W^T == W^T, so this is a pure
    # VPU broadcast-add; no MXU involvement at all.
    z = wt_ref[...] + b_ref[...]                     # (B, Out) f32

    # Output tensor the caller keeps: exact sigmoid (exp on EUP, divide on VPU).
    out_ref[...] = 1.0 / (1.0 + jnp.exp(-z))

    # Loss path: gather z[0, action] via a lane mask (PyTorch loss always reads
    # row 0 of the output, mirrored here on purpose).
    z0 = z[0:1, :]                                   # (1, Out)
    lane = jax.lax.broadcasted_iota(jnp.int32, z0.shape, 1)
    z_a = jnp.sum(jnp.where(lane == a, z0, 0.0), axis=1, keepdims=True)  # (1,1)

    # Stable log-sigmoid: log(sigmoid(z)) = min(z,0) - log(1 + exp(-|z|)).
    log_sig = jnp.minimum(z_a, 0.0) - jnp.log(1.0 + jnp.exp(-jnp.abs(z_a)))
    loss_ref[...] = -(log_sig * r)


def bandit_forward_loss(w_t, b, action, reward):
    """w_t: (In, Out) f32, b: (1, Out) f32, action: (1,) int32, reward: (1,) f32.

    Returns (output (In, Out) f32, loss scalar f32).  Assumes the forward input
    is one_hot(arange(In)) == eye(In), as in the original training script.
    """
    In, Out = w_t.shape
    out, loss = pl.pallas_call(
        fused_bandit_kernel,
        out_shape=(
            jax.ShapeDtypeStruct((In, Out), jnp.float32),
            jax.ShapeDtypeStruct((1, 1), jnp.float32),
        ),
        in_specs=[
            pl.BlockSpec(memory_space=pltpu.MemorySpace.SMEM),  # action
            pl.BlockSpec(memory_space=pltpu.MemorySpace.SMEM),  # reward
            pl.BlockSpec(memory_space=pltpu.MemorySpace.VMEM),  # W^T
            pl.BlockSpec(memory_space=pltpu.MemorySpace.VMEM),  # b
        ],
        out_specs=(
            pl.BlockSpec(memory_space=pltpu.MemorySpace.VMEM),  # output
            pl.BlockSpec(memory_space=pltpu.MemorySpace.VMEM),  # loss (1,1)
        ),
    )(action, reward, w_t, b)
    return out, loss[0, 0]


if __name__ == "__main__":
    # Bandit environment sizes from con_bandit: 6 bandits x 4 actions.
    num_bandits, num_actions = 6, 4

    key = jax.random.PRNGKey(0)
    kw, kb = jax.random.split(key)

    # Deterministic nn.Linear-style init: U(-1/sqrt(in), 1/sqrt(in)).
    bound = 1.0 / jnp.sqrt(jnp.float32(num_bandits))
    W = jax.random.uniform(kw, (num_actions, num_bandits), jnp.float32, -bound, bound)
    b = jax.random.uniform(kb, (num_actions,), jnp.float32, -bound, bound)

    # one_hot = F.one_hot(arange(num_bandits)).float()  (identity matrix)
    one_hot = jnp.eye(num_bandits, dtype=jnp.float32)

    action = jnp.array([2], dtype=jnp.int32)
    reward = jnp.array([-1.0], dtype=jnp.float32)

    # Fused agent.forward + loss.forward in a single pallas_call.
    output, loss_val = bandit_forward_loss(W.T, b.reshape(1, num_actions), action, reward)
    output = jax.block_until_ready(output)
    loss_val = jax.block_until_ready(loss_val)

    # Pure-JAX reference check (original module semantics).
    ref_out = jax.nn.sigmoid(one_hot @ W.T + b)
    ref_loss = -(jnp.log(ref_out[0, action[0]]) * reward[0])
    assert jnp.allclose(output, ref_out, atol=1e-5), "agent forward mismatch"
    assert jnp.allclose(loss_val, ref_loss, atol=1e-5), "loss mismatch"

    # TODO(synk): con_bandit env (numpy RNG) and the backward/optimizer step are
    # host-side logic, not part of the forward kernel.
    print("KERNEL_OK")
</pallas_src>

<mosaic_0001>
module attributes {stable_mosaic.version = 11 : i64} {
  func.func @fused_bandit_kernel(%arg0: memref<1xi32, #tpu.memory_space<smem>>, %arg1: memref<1xf32, #tpu.memory_space<smem>>, %arg2: memref<6x4xf32, #tpu.memory_space<vmem>>, %arg3: memref<1x4xf32, #tpu.memory_space<vmem>>, %arg4: memref<6x4xf32, #tpu.memory_space<vmem>>, %arg5: memref<1x1xf32, #tpu.memory_space<vmem>>) attributes {dimension_semantics = [], scalar_prefetch = 0 : i64, scratch_operands = 0 : i64, tpu.core_type = #tpu.core_type<tc>} {
    %c0 = arith.constant 0 : index
    %0 = memref.load %arg0[%c0] : memref<1xi32, #tpu.memory_space<smem>>
    %c0_0 = arith.constant 0 : index
    %1 = memref.load %arg1[%c0_0] : memref<1xf32, #tpu.memory_space<smem>>
    %c0_1 = arith.constant 0 : index
    %c0_2 = arith.constant 0 : index
    %2 = vector.load %arg2[%c0_1, %c0_2] : memref<6x4xf32, #tpu.memory_space<vmem>>, vector<6x4xf32>
    %c0_3 = arith.constant 0 : index
    %c0_4 = arith.constant 0 : index
    %3 = vector.load %arg3[%c0_3, %c0_4] : memref<1x4xf32, #tpu.memory_space<vmem>>, vector<1x4xf32>
    %4 = vector.broadcast %3 : vector<1x4xf32> to vector<6x4xf32>
    %5 = arith.addf %2, %4 : vector<6x4xf32>
    %cst = arith.constant 0.000000e+00 : f32
    %6 = vector.broadcast %cst : f32 to vector<6x4xf32>
    %7 = arith.subf %6, %5 : vector<6x4xf32>
    %8 = math.exp %7 : vector<6x4xf32>
    %cst_5 = arith.constant 1.000000e+00 : f32
    %9 = vector.broadcast %cst_5 : f32 to vector<6x4xf32>
    %10 = arith.addf %9, %8 : vector<6x4xf32>
    %cst_6 = arith.constant 1.000000e+00 : f32
    %11 = vector.broadcast %cst_6 : f32 to vector<6x4xf32>
    %12 = arith.divf %11, %10 : vector<6x4xf32>
    %c0_7 = arith.constant 0 : index
    %c0_8 = arith.constant 0 : index
    %13 = vector.load %arg4[%c0_7, %c0_8] : memref<6x4xf32, #tpu.memory_space<vmem>>, vector<6x4xf32>
    tpu.vector_store %arg4[%c0_7, %c0_8], %12 {strides = array<i32>} : memref<6x4xf32, #tpu.memory_space<vmem>>, vector<6x4xf32>,
    %14 = vector.extract_strided_slice %5 {offsets = [0, 0], sizes = [1, 4], strides = [1, 1]} : vector<6x4xf32> to vector<1x4xf32>
    %15 = tpu.iota {dimensions = array<i32: 1>} : vector<1x4xi32>
    %16 = vector.broadcast %0 : i32 to vector<1x4xi32>
    %17 = arith.cmpi eq, %15, %16 : vector<1x4xi32>
    %cst_9 = arith.constant 0.000000e+00 : f32
    %18 = vector.broadcast %cst_9 : f32 to vector<1x4xf32>
    %19 = arith.select %17, %14, %18 : vector<1x4xi1>, vector<1x4xf32>
    %cst_10 = arith.constant dense<0.000000e+00> : vector<1xf32>
    %20 = vector.multi_reduction <add>, %19, %cst_10 [1] : vector<1x4xf32> to vector<1xf32>
    %21 = vector.shape_cast %20 : vector<1xf32> to vector<1x1xf32>
    %cst_11 = arith.constant 0.000000e+00 : f32
    %22 = vector.broadcast %cst_11 : f32 to vector<1x1xf32>
    %23 = arith.minimumf %21, %22 : vector<1x1xf32>
    %24 = math.absf %21 : vector<1x1xf32>
    %cst_12 = arith.constant 0.000000e+00 : f32
    %25 = vector.broadcast %cst_12 : f32 to vector<1x1xf32>
    %26 = arith.subf %25, %24 : vector<1x1xf32>
    %27 = math.exp %26 : vector<1x1xf32>
    %cst_13 = arith.constant 1.000000e+00 : f32
    %28 = vector.broadcast %cst_13 : f32 to vector<1x1xf32>
    %29 = arith.addf %28, %27 : vector<1x1xf32>
    %30 = math.log %29 : vector<1x1xf32>
    %31 = arith.subf %23, %30 : vector<1x1xf32>
    %32 = vector.broadcast %1 : f32 to vector<1x1xf32>
    %33 = arith.mulf %31, %32 : vector<1x1xf32>
    %cst_14 = arith.constant 0.000000e+00 : f32
    %34 = vector.broadcast %cst_14 : f32 to vector<1x1xf32>
    %35 = arith.subf %34, %33 : vector<1x1xf32>
    %c0_15 = arith.constant 0 : index
    %c0_16 = arith.constant 0 : index
    %36 = vector.load %arg5[%c0_15, %c0_16] : memref<1x1xf32, #tpu.memory_space<vmem>>, vector<1x1xf32>
    tpu.vector_store %arg5[%c0_15, %c0_16], %35 {strides = array<i32>} : memref<1x1xf32, #tpu.memory_space<vmem>>, vector<1x1xf32>,
    return
  }
}

</mosaic_0001>

<llo_original>
// kernel: tpu_custom_call.1
$region0: #{tpu_custom_call.1}
  #allocation0 [shape = 'u32[]', space=smem, size = 0x4, offset = 0x4, fixed_abs, tag = 'smem constant byte address 0x4 - core index']
  #allocation1 [shape = 'u32[72,128]{1,0:T(1,128)}', space=vmem, size = 0x9000, scoped, tag = 'internal scratch']
  #allocation2 [shape = 's32[1]{0:T(128)S(6)}', space=smem, size = 0x200, scoped, tag = 'scoped memory for tpu_custom_call.1']
  #allocation3 [shape = 'f32[1]{0:T(128)S(6)}', space=smem, size = 0x200, scoped, tag = 'scoped memory for tpu_custom_call.1']
  %s0 = inlined_call_operand.<no memory space> [shape: s32[1], index: 0, kind: input, shape index: {}]
  %s1 = inlined_call_operand.<no memory space> [shape: f32[1], index: 1, kind: input, shape index: {}]
  %s2 = inlined_call_operand.vmem [shape: f32[6,4], index: 2, kind: input, shape index: {}]
  %s3 = inlined_call_operand.vmem [shape: f32[1,4], index: 3, kind: input, shape index: {}]
  %s4 = inlined_call_operand.vmem [shape: f32[6,4], index: 4, kind: output, shape index: {0}]
  %s5 = inlined_call_operand.hbm [shape: f32[1,1], index: 5, kind: output, shape index: {1}]
  %6 = xla_tuple %s4, %s5
  %s7 = sld [smem:[#allocation0]]
  $region34: #{tpu_custom_call.1} parent=0
    _
  %s9 = ssub.s32 1, %s7
  %s10 = scalar_select 0, %s9, %s7
  %11 = sst [smem:[#allocation2]] %s0
  %12 = sst [smem:[#allocation3]] %s1
  $region1: #{tpu_custom_call.1} parent=0
    #allocation4 [shape = 'u8[512]{0}', space=vmem, size = 0x400, scoped, tag = 'output window, operand 1, single buffered']
    #allocation5 [shape = 's32[1]{0}', space=sflag, size = 0x4, scoped, tag = 'scoped memory for tpu_custom_call.1']
    %13 = vsyncpa [#allocation5], 0
    // Predicated region
    $region2: #{tpu_custom_call.1} parent=1 // pred_check
      _
    $region3: #{tpu_custom_call.1} parent=1 // pred_check_branch
      %15 = sbr.rel (0) target = $region5
    $region4: #{tpu_custom_call.1} parent=1 // pred_region
      _
    $region5: #{tpu_custom_call.1} parent=1 // pred_fallthru
      _
    // Predicated region
    $region6: #{tpu_custom_call.1} parent=1 // pred_check
      _
    $region7: #{tpu_custom_call.1} parent=1 // pred_check_branch
      %17 = sbr.rel (0) target = $region9
    $region8: #{tpu_custom_call.1} parent=1 // pred_region
      _
    $region9: #{tpu_custom_call.1} parent=1 // pred_fallthru
      _
    // Predicated region
    $region10: #{tpu_custom_call.1} parent=1 // pred_check
      _
    $region11: #{tpu_custom_call.1} parent=1 // pred_check_branch
      %19 = sbr.rel (0) target = $region13
    $region12: #{tpu_custom_call.1} parent=1 // pred_region
      _
    $region13: #{tpu_custom_call.1} parent=1 // pred_fallthru
      _
    // Predicated region
    $region14: #{tpu_custom_call.1} parent=1 // pred_check
      _
    $region15: #{tpu_custom_call.1} parent=1 // pred_check_branch
      %21 = sbr.rel (0) target = $region17
    $region16: #{tpu_custom_call.1} parent=1 // pred_region
      _
    $region17: #{tpu_custom_call.1} parent=1 // pred_fallthru
      _
    %s22 = sld [smem:[#allocation2]]
    %s23 = sld [smem:[#allocation3]]
    %v24 = vld [vmem:[%s2] sm:$0x3f]
    %v25 = vld [vmem:[%s3] sm:$0x1]
    %v27 = vperm.slane %v25, 0
    %v29 = vadd.f32 %v24, %v27
    %v30 = vsub.f32 0.0, %v29
    %v31 = vmul.f32 %v30, 1.442695
    %v32 = vpow.pop %v31
    %v33 = vadd.f32 %v32, 1.0
    %v34 = vrcp.pop %v33
    %v35 = vmul.f32 %v33, %v34
    %v36 = vsub.f32 1.0, %v35
    %v37 = vmul.f32 %v34, %v36
    %v38 = vadd.f32 %v34, %v37
    %vm39 = vweird.f32 %v33
    %vm40 = vweird.f32 %v34
    %vm41 = vmor %vm39, %vm40
    %v42 = vsel %vm41, %v34, %v38
    %v43 = vand.u32 2147483647, %v33
    %vm44 = vcmp.eq.f32.partialorder %v43, 8.507059e+37
    %v45 = vand.u32 %v33, 2147483648
    %v46 = vor.u32 1.1754944e-38, %v45
    %v47 = vsel %vm44, %v46, %v42
    %v48 = vmul.f32 1.0, %v47
    %vm49 = vcmask 29696
    %50 = vst.msk [vmem:[%s4] sm:$0x3f] %vm49, %v48
    %v51 = vlaneseq
    %v52 = vand.u32 %v51, 127
    %v53 = vstv %s22
    %vm54 = vcmp.eq.s32.totalorder %v52, %v53
    %v55 = vsel %vm54, %v29, 0.0
    %vm56 = vcmask 24576
    %v57 = vsel %vm56, %v55, 0.0
    %58 = vadd.xlane.f32.xlu0 %v57
    %v59 = vpop.xlane.xlu0 %58
    %v60 = vmin.f32 %v59, 0.0
    %v61 = vand.u32 2147483647, %v59
    %v62 = vsub.f32 0.0, %v61
    %v63 = vmul.f32 %v62, 1.442695
    %v64 = vpow.pop %v63
    %v65 = vadd.f32 %v64, 1.0
    %v66 = vlog2.pop %v65
    %v67 = vmul.f32 %v66, 0.6931472
    %v68 = vsub.f32 %v60, %v67
    %v69 = vstv %s23
    %v70 = vmul.f32 %v68, %v69
    %v71 = vsub.f32 0.0, %v70
    %vm72 = vcmask 0
    %73 = vst.msk [vmem:[#allocation4] sm:$0x1] %vm72, %v71
    // Predicated region
    $region18: #{tpu_custom_call.1} parent=1 // pred_check
      _
    $region19: #{tpu_custom_call.1} parent=1 // pred_check_branch
      %75 = sbr.rel (0) target = $region21
    $region20: #{tpu_custom_call.1} parent=1 // pred_region
      _
    $region21: #{tpu_custom_call.1} parent=1 // pred_fallthru
      _
    // Predicated region
    $region22: #{tpu_custom_call.1} parent=1 // pred_check
      _
    $region23: #{tpu_custom_call.1} parent=1 // pred_check_branch
      %77 = sbr.rel (0) target = $region25
    $region24: #{tpu_custom_call.1} parent=1 // pred_region
      %79 = vsyncadd [#allocation5], 0
      %s81 = sshll.u32 [#allocation4], 4
      %s82 = int_to_ptr.vmem [resolvable:$true] %s81
      %s83 = sshll.u32 %s5, 4
      %s84 = int_to_ptr.hbm [resolvable:$true] %s83
      %86 = dma.vmem_to_hbm [thread:$0]  %s82, 16, %s84, [#allocation5]
    $region25: #{tpu_custom_call.1} parent=1 // pred_fallthru
      _
    // Predicated region
    $region26: #{tpu_custom_call.1} parent=1 // pred_check
      _
    $region27: #{tpu_custom_call.1} parent=1 // pred_check_branch
      %88 = sbr.rel (0) target = $region29
    $region28: #{tpu_custom_call.1} parent=1 // pred_region
      _
    $region29: #{tpu_custom_call.1} parent=1 // pred_fallthru
      _
    // Predicated region
    $region30: #{tpu_custom_call.1} parent=1 // pred_check
      _
    $region31: #{tpu_custom_call.1} parent=1 // pred_check_branch
      %90 = sbr.rel (0) target = $region33
    $region32: #{tpu_custom_call.1} parent=1 // pred_region
      %92 = dma.done [#allocation5], 16
    $region33: #{tpu_custom_call.1} parent=1 // pred_fallthru
      _
    %93 = vsyncpa [#allocation5], 1

</llo_original>
